<compile_context>
chip_gen: v7x
topology: tpu7x:2x2x1
jax: 0.10.0
libtpu: 0.0.40
codegen_flags: <defaults>
</compile_context>

<pallas_src>
import functools

import numpy as np
import jax
import jax.numpy as jnp
from jax.experimental import pallas as pl
from jax.experimental.pallas import tpu as pltpu


# ----------------------------------------------------------------------------
# Deterministic "weights" (match the PyTorch module __init__)
# ----------------------------------------------------------------------------
def _gaussian_1d(ksize=7, sigma=0.8):
    # cv2.getGaussianKernel(7, 0.8): exp(-(i-c)^2 / (2 sigma^2)), normalized.
    xs = np.arange(ksize, dtype=np.float64) - (ksize - 1) / 2.0
    k = np.exp(-(xs ** 2) / (2.0 * sigma ** 2))
    return (k / k.sum()).astype(np.float32)          # separable 1-D gaussian


G1 = _gaussian_1d()                                   # (7,) float32

# direct_filter channel i = center - neighbor at offset (i//3-1, i%3-1),
# except i == 4 which uses offset (+1, +1) (matches the reference kernel).
DIRECT_OFFS = [((i // 3 - 1, i % 3 - 1) if i != 4 else (1, 1)) for i in range(8)]

# Direction quantization.  The reference computes
#   idx = round((atan2(gy,gx)*(180/3.14159)+180)/45) % 8
# which (up to measure-zero exact-boundary angles) equals a comparison of |gy|
# against tan(22.5deg)*|gx| and tan(67.5deg)*|gx| plus the signs of gx, gy.
_PI_REF = 3.14159
_T1 = float(np.tan(22.5 * _PI_REF / 180.0))
_T2 = float(np.tan(67.5 * _PI_REF / 180.0))


def _shift(a, dy, dx):
    """result[y, x] = a[y + dy, x + dx] (circular roll on the XLU).

    Callers only consume positions whose sources stay inside the slab, so the
    wrap-around never reaches a used output.
    """
    hh, ww = a.shape
    if dy:
        a = pltpu.roll(a, (-dy) % hh, 0)
    if dx:
        a = pltpu.roll(a, (-dx) % ww, 1)
    return a


# ----------------------------------------------------------------------------
# Kernel 1: grayscale + separable gaussian + sobel + magnitude + direction idx
# ----------------------------------------------------------------------------
def _sobel_dir_kernel(x_ref, mag_ref, idx_ref, *, H, W):
    # x_ref block: (1, 3, HH, WW) reflect(4)-padded RGB; real image at
    # rows/cols [4, 4+H) x [4, 4+W).
    hh, ww = x_ref.shape[2], x_ref.shape[3]
    gray = (x_ref[0, 0] + x_ref[0, 1] + x_ref[0, 2]) * jnp.float32(1.0 / 3.0)

    # separable 7x7 gaussian: row pass then column pass (14 taps vs 49)
    tmp = float(G1[3]) * gray
    for k in (0, 1, 2, 4, 5, 6):
        tmp = tmp + float(G1[k]) * _shift(gray, 0, k - 3)
    blur = float(G1[3]) * tmp
    for k in (0, 1, 2, 4, 5, 6):
        blur = blur + float(G1[k]) * _shift(tmp, k - 3, 0)

    # separable 3x3 sobel
    bl = _shift(blur, 0, -1)               # blur(y, x-1)
    br = _shift(blur, 0, +1)               # blur(y, x+1)
    h = bl - br
    s = bl + 2.0 * blur + br
    gx = _shift(h, -1, 0) + 2.0 * h + _shift(h, +1, 0)
    gy = _shift(s, -1, 0) - _shift(s, +1, 0)

    mag = jnp.sqrt(gx * gx + gy * gy)

    # Zero outside the real image so kernel 2 sees the direct filter's
    # zero padding at the image border (and so the alignment padding is inert).
    row = jax.lax.broadcasted_iota(jnp.int32, (hh, ww), 0)
    col = jax.lax.broadcasted_iota(jnp.int32, (hh, ww), 1)
    valid = (row >= 4) & (row < 4 + H) & (col >= 4) & (col < 4 + W)
    mag_ref[0] = jnp.where(valid, mag, 0.0)

    # Quantized gradient direction == round(atan2-based ori / 45) % 8,
    # done with compares/selects on the VPU (no atan2 needed).
    ax = jnp.abs(gx)
    ay = jnp.abs(gy)
    near_h = ay < _T1 * ax                 # within 22.5 deg of the x axis
    near_v = ay >= _T2 * ax                # within 22.5 deg of the y axis
    idx_h = jnp.where(gx > 0.0, 4, 0)
    idx_v = jnp.where(gy > 0.0, 6, jnp.where(gy < 0.0, 2, 4))   # gx==gy==0 -> 4
    idx_d = jnp.where(gx > 0.0, jnp.where(gy > 0.0, 5, 3),
                      jnp.where(gy > 0.0, 7, 1))
    idx_ref[0] = jnp.where(near_h, idx_h, jnp.where(near_v, idx_v, idx_d))


# ----------------------------------------------------------------------------
# Kernel 2: direct filter + non-max suppression + thresholding
# ----------------------------------------------------------------------------
def _nms_threshold_kernel(mag_ref, idx_ref, thr_ref, out_ref):
    # mag_ref/out_ref blocks: (1, HH, WW).  idx_ref: batch-0 direction indices
    # (reference quirk: `indices[0, :]` is applied to every batch element).
    m = mag_ref[0]
    idx = idx_ref[0]
    rows = {dy: (_shift(m, dy, 0) if dy else m) for dy in (-1, 0, 1)}
    pos = jnp.zeros_like(m)
    neg = jnp.zeros_like(m)
    for i, (dy, dx) in enumerate(DIRECT_OFFS):
        nb = _shift(rows[dy], 0, dx) if dx else rows[dy]
        d_i = m - nb                       # direct_filter channel i
        pos = jnp.where(idx == i, d_i, pos)
        # idx_neg == (idx + 4) % 8, so pixels with idx == (i+4)%8 take d_i
        neg = jnp.where(idx == ((i + 4) % 8), d_i, neg)
    keep = jnp.where(jnp.minimum(pos, neg) > 0.0, m, 0.0)
    thr = thr_ref[pl.program_id(0)]        # per-image 0.85 quantile
    out_ref[0] = jnp.where(keep < thr, 0.0, keep)


# ----------------------------------------------------------------------------
# Wrapper
# ----------------------------------------------------------------------------
def _round_up(v, m):
    return (v + m - 1) // m * m


@jax.jit
def canny_forward(x):
    """x: [B, 3, H, W] float32 -> grad_mag: [B, 1, H, W] float32."""
    B, C, H, W = x.shape
    assert C == 3
    x = x.astype(jnp.float32)

    HH = _round_up(H + 8, 8)
    WW = _round_up(W + 8, 128)

    # One reflect pad of 4 replaces the reference's reflect(3) (gaussian) +
    # reflect(1) (sobel); the extra constant pad only aligns the slab to
    # (8, 128) tiles for lane-dense loads/stores.
    xr = jnp.pad(x, ((0, 0), (0, 0), (4, 4), (4, 4)), mode="reflect")
    xp = jnp.pad(xr, ((0, 0), (0, 0), (0, HH - (H + 8)), (0, WW - (W + 8))))

    params = pltpu.CompilerParams(
        dimension_semantics=("parallel",),          # batch items independent
        vmem_limit_bytes=48 * 1024 * 1024,
    )
    # TODO(synk): for very large images (>~1k^2 on v7x's 64 MiB VMEM) tile the
    # grid along H with a 4-row halo instead of whole-image blocks.

    mag, idx = pl.pallas_call(
        functools.partial(_sobel_dir_kernel, H=H, W=W),
        out_shape=(jax.ShapeDtypeStruct((B, HH, WW), jnp.float32),
                   jax.ShapeDtypeStruct((B, HH, WW), jnp.int32)),
        grid=(B,),
        in_specs=[pl.BlockSpec((1, 3, HH, WW), lambda b: (b, 0, 0, 0))],
        out_specs=(pl.BlockSpec((1, HH, WW), lambda b: (b, 0, 0)),
                   pl.BlockSpec((1, HH, WW), lambda b: (b, 0, 0))),
        compiler_params=params,
    )(xp)

    # Per-image 0.85 quantile of the pre-NMS gradient magnitude.
    # TODO(synk): kept as the XLA sort-based jnp.quantile to preserve
    # torch.quantile's exact linear interpolation; an O(N) in-kernel
    # histogram/bisection would be faster but changes numerics near the cut.
    thr = jnp.quantile(
        mag[:, 4:4 + H, 4:4 + W].reshape(B, -1), 0.85, axis=1
    ).astype(jnp.float32)

    out = pl.pallas_call(
        _nms_threshold_kernel,
        out_shape=jax.ShapeDtypeStruct((B, HH, WW), jnp.float32),
        grid=(B,),
        in_specs=[
            pl.BlockSpec((1, HH, WW), lambda b: (b, 0, 0)),
            pl.BlockSpec((1, HH, WW), lambda b: (0, 0, 0)),  # batch-0 idx quirk
            pl.BlockSpec(memory_space=pltpu.MemorySpace.SMEM),
        ],
        out_specs=pl.BlockSpec((1, HH, WW), lambda b: (b, 0, 0)),
        compiler_params=params,
    )(mag, idx, thr)

    return out[:, None, 4:4 + H, 4:4 + W]


if __name__ == "__main__":
    key = jax.random.PRNGKey(0)
    x = jax.random.uniform(key, (2, 3, 16, 16), dtype=jnp.float32)
    y = canny_forward(x)
    jax.block_until_ready(y)
    assert y.shape == (2, 1, 16, 16) and y.dtype == jnp.float32
    assert bool(jnp.all(jnp.isfinite(y)))
    print("KERNEL_OK")
</pallas_src>

<mosaic_0001>
module attributes {stable_mosaic.version = 11 : i64} {
  func.func @_sobel_dir_kernel(%arg0: i32, %arg1: memref<1x3x24x128xf32, #tpu.memory_space<vmem>>, %arg2: memref<1x24x128xf32, #tpu.memory_space<vmem>>, %arg3: memref<1x24x128xi32, #tpu.memory_space<vmem>>) attributes {dimension_semantics = [#tpu.dimension_semantics<parallel>], iteration_bounds = array<i64: 2>, scalar_prefetch = 0 : i64, scratch_operands = 0 : i64, tpu.core_type = #tpu.core_type<tc>, window_params = [{transform_indices = @transform_0, window_bounds = array<i64: 1, 3, 24, 128>}, {transform_indices = @transform_1, window_bounds = array<i64: 1, 24, 128>}, {transform_indices = @transform_2, window_bounds = array<i64: 1, 24, 128>}]} {
    %c0 = arith.constant 0 : index
    %c0_0 = arith.constant 0 : index
    %c0_1 = arith.constant 0 : index
    %c0_2 = arith.constant 0 : index
    %0 = vector.load %arg1[%c0, %c0_0, %c0_1, %c0_2] : memref<1x3x24x128xf32, #tpu.memory_space<vmem>>, vector<1x1x24x128xf32>
    %1 = vector.shape_cast %0 : vector<1x1x24x128xf32> to vector<24x128xf32>
    %c0_3 = arith.constant 0 : index
    %c1 = arith.constant 1 : index
    %c0_4 = arith.constant 0 : index
    %c0_5 = arith.constant 0 : index
    %2 = vector.load %arg1[%c0_3, %c1, %c0_4, %c0_5] : memref<1x3x24x128xf32, #tpu.memory_space<vmem>>, vector<1x1x24x128xf32>
    %3 = vector.shape_cast %2 : vector<1x1x24x128xf32> to vector<24x128xf32>
    %4 = arith.addf %1, %3 : vector<24x128xf32>
    %c0_6 = arith.constant 0 : index
    %c2 = arith.constant 2 : index
    %c0_7 = arith.constant 0 : index
    %c0_8 = arith.constant 0 : index
    %5 = vector.load %arg1[%c0_6, %c2, %c0_7, %c0_8] : memref<1x3x24x128xf32, #tpu.memory_space<vmem>>, vector<1x1x24x128xf32>
    %6 = vector.shape_cast %5 : vector<1x1x24x128xf32> to vector<24x128xf32>
    %7 = arith.addf %4, %6 : vector<24x128xf32>
    %cst = arith.constant 0.333333343 : f32
    %8 = vector.broadcast %cst : f32 to vector<24x128xf32>
    %9 = arith.mulf %7, %8 : vector<24x128xf32>
    %cst_9 = arith.constant 0.498676449 : f32
    %10 = vector.broadcast %cst_9 : f32 to vector<24x128xf32>
    %11 = arith.mulf %10, %9 : vector<24x128xf32>
    %c3_i32 = arith.constant 3 : i32
    %12 = tpu.dynamic_rotate %9 by %c3_i32 dim 1 : vector<24x128xf32>, i32 -> vector<24x128xf32>
    %cst_10 = arith.constant 4.40743373E-4 : f32
    %13 = vector.broadcast %cst_10 : f32 to vector<24x128xf32>
    %14 = arith.mulf %13, %12 : vector<24x128xf32>
    %15 = arith.addf %11, %14 : vector<24x128xf32>
    %c2_i32 = arith.constant 2 : i32
    %16 = tpu.dynamic_rotate %9 by %c2_i32 dim 1 : vector<24x128xf32>, i32 -> vector<24x128xf32>
    %cst_11 = arith.constant 0.0219103135 : f32
    %17 = vector.broadcast %cst_11 : f32 to vector<24x128xf32>
    %18 = arith.mulf %17, %16 : vector<24x128xf32>
    %19 = arith.addf %15, %18 : vector<24x128xf32>
    %c1_i32 = arith.constant 1 : i32
    %20 = tpu.dynamic_rotate %9 by %c1_i32 dim 1 : vector<24x128xf32>, i32 -> vector<24x128xf32>
    %cst_12 = arith.constant 0.228310719 : f32
    %21 = vector.broadcast %cst_12 : f32 to vector<24x128xf32>
    %22 = arith.mulf %21, %20 : vector<24x128xf32>
    %23 = arith.addf %19, %22 : vector<24x128xf32>
    %c127_i32 = arith.constant 127 : i32
    %24 = tpu.dynamic_rotate %9 by %c127_i32 dim 1 : vector<24x128xf32>, i32 -> vector<24x128xf32>
    %cst_13 = arith.constant 0.228310719 : f32
    %25 = vector.broadcast %cst_13 : f32 to vector<24x128xf32>
    %26 = arith.mulf %25, %24 : vector<24x128xf32>
    %27 = arith.addf %23, %26 : vector<24x128xf32>
    %c126_i32 = arith.constant 126 : i32
    %28 = tpu.dynamic_rotate %9 by %c126_i32 dim 1 : vector<24x128xf32>, i32 -> vector<24x128xf32>
    %cst_14 = arith.constant 0.0219103135 : f32
    %29 = vector.broadcast %cst_14 : f32 to vector<24x128xf32>
    %30 = arith.mulf %29, %28 : vector<24x128xf32>
    %31 = arith.addf %27, %30 : vector<24x128xf32>
    %c125_i32 = arith.constant 125 : i32
    %32 = tpu.dynamic_rotate %9 by %c125_i32 dim 1 : vector<24x128xf32>, i32 -> vector<24x128xf32>
    %cst_15 = arith.constant 4.40743373E-4 : f32
    %33 = vector.broadcast %cst_15 : f32 to vector<24x128xf32>
    %34 = arith.mulf %33, %32 : vector<24x128xf32>
    %35 = arith.addf %31, %34 : vector<24x128xf32>
    %cst_16 = arith.constant 0.498676449 : f32
    %36 = vector.broadcast %cst_16 : f32 to vector<24x128xf32>
    %37 = arith.mulf %36, %35 : vector<24x128xf32>
    %c3_i32_17 = arith.constant 3 : i32
    %38 = tpu.dynamic_rotate %35 by %c3_i32_17 dim 0 : vector<24x128xf32>, i32 -> vector<24x128xf32>
    %cst_18 = arith.constant 4.40743373E-4 : f32
    %39 = vector.broadcast %cst_18 : f32 to vector<24x128xf32>
    %40 = arith.mulf %39, %38 : vector<24x128xf32>
    %41 = arith.addf %37, %40 : vector<24x128xf32>
    %c2_i32_19 = arith.constant 2 : i32
    %42 = tpu.dynamic_rotate %35 by %c2_i32_19 dim 0 : vector<24x128xf32>, i32 -> vector<24x128xf32>
    %cst_20 = arith.constant 0.0219103135 : f32
    %43 = vector.broadcast %cst_20 : f32 to vector<24x128xf32>
    %44 = arith.mulf %43, %42 : vector<24x128xf32>
    %45 = arith.addf %41, %44 : vector<24x128xf32>
    %c1_i32_21 = arith.constant 1 : i32
    %46 = tpu.dynamic_rotate %35 by %c1_i32_21 dim 0 : vector<24x128xf32>, i32 -> vector<24x128xf32>
    %cst_22 = arith.constant 0.228310719 : f32
    %47 = vector.broadcast %cst_22 : f32 to vector<24x128xf32>
    %48 = arith.mulf %47, %46 : vector<24x128xf32>
    %49 = arith.addf %45, %48 : vector<24x128xf32>
    %c23_i32 = arith.constant 23 : i32
    %50 = tpu.dynamic_rotate %35 by %c23_i32 dim 0 : vector<24x128xf32>, i32 -> vector<24x128xf32>
    %cst_23 = arith.constant 0.228310719 : f32
    %51 = vector.broadcast %cst_23 : f32 to vector<24x128xf32>
    %52 = arith.mulf %51, %50 : vector<24x128xf32>
    %53 = arith.addf %49, %52 : vector<24x128xf32>
    %c22_i32 = arith.constant 22 : i32
    %54 = tpu.dynamic_rotate %35 by %c22_i32 dim 0 : vector<24x128xf32>, i32 -> vector<24x128xf32>
    %cst_24 = arith.constant 0.0219103135 : f32
    %55 = vector.broadcast %cst_24 : f32 to vector<24x128xf32>
    %56 = arith.mulf %55, %54 : vector<24x128xf32>
    %57 = arith.addf %53, %56 : vector<24x128xf32>
    %c21_i32 = arith.constant 21 : i32
    %58 = tpu.dynamic_rotate %35 by %c21_i32 dim 0 : vector<24x128xf32>, i32 -> vector<24x128xf32>
    %cst_25 = arith.constant 4.40743373E-4 : f32
    %59 = vector.broadcast %cst_25 : f32 to vector<24x128xf32>
    %60 = arith.mulf %59, %58 : vector<24x128xf32>
    %61 = arith.addf %57, %60 : vector<24x128xf32>
    %c1_i32_26 = arith.constant 1 : i32
    %62 = tpu.dynamic_rotate %61 by %c1_i32_26 dim 1 : vector<24x128xf32>, i32 -> vector<24x128xf32>
    %c127_i32_27 = arith.constant 127 : i32
    %63 = tpu.dynamic_rotate %61 by %c127_i32_27 dim 1 : vector<24x128xf32>, i32 -> vector<24x128xf32>
    %64 = arith.subf %62, %63 : vector<24x128xf32>
    %cst_28 = arith.constant 2.000000e+00 : f32
    %65 = vector.broadcast %cst_28 : f32 to vector<24x128xf32>
    %66 = arith.mulf %65, %61 : vector<24x128xf32>
    %67 = arith.addf %62, %66 : vector<24x128xf32>
    %68 = arith.addf %67, %63 : vector<24x128xf32>
    %c1_i32_29 = arith.constant 1 : i32
    %69 = tpu.dynamic_rotate %64 by %c1_i32_29 dim 0 : vector<24x128xf32>, i32 -> vector<24x128xf32>
    %cst_30 = arith.constant 2.000000e+00 : f32
    %70 = vector.broadcast %cst_30 : f32 to vector<24x128xf32>
    %71 = arith.mulf %70, %64 : vector<24x128xf32>
    %72 = arith.addf %69, %71 : vector<24x128xf32>
    %c23_i32_31 = arith.constant 23 : i32
    %73 = tpu.dynamic_rotate %64 by %c23_i32_31 dim 0 : vector<24x128xf32>, i32 -> vector<24x128xf32>
    %74 = arith.addf %72, %73 : vector<24x128xf32>
    %c1_i32_32 = arith.constant 1 : i32
    %75 = tpu.dynamic_rotate %68 by %c1_i32_32 dim 0 : vector<24x128xf32>, i32 -> vector<24x128xf32>
    %c23_i32_33 = arith.constant 23 : i32
    %76 = tpu.dynamic_rotate %68 by %c23_i32_33 dim 0 : vector<24x128xf32>, i32 -> vector<24x128xf32>
    %77 = arith.subf %75, %76 : vector<24x128xf32>
    %78 = arith.mulf %74, %74 : vector<24x128xf32>
    %79 = arith.mulf %77, %77 : vector<24x128xf32>
    %80 = arith.addf %78, %79 : vector<24x128xf32>
    %81 = math.sqrt %80 : vector<24x128xf32>
    %82 = tpu.iota {dimensions = array<i32: 0>} : vector<24x128xi32>
    %83 = tpu.iota {dimensions = array<i32: 1>} : vector<24x128xi32>
    %c4_i32 = arith.constant 4 : i32
    %84 = vector.broadcast %c4_i32 : i32 to vector<24x128xi32>
    %85 = arith.cmpi sge, %82, %84 : vector<24x128xi32>
    %c20_i32 = arith.constant 20 : i32
    %86 = vector.broadcast %c20_i32 : i32 to vector<24x128xi32>
    %87 = arith.cmpi slt, %82, %86 : vector<24x128xi32>
    %88 = arith.andi %85, %87 : vector<24x128xi1>
    %c4_i32_34 = arith.constant 4 : i32
    %89 = vector.broadcast %c4_i32_34 : i32 to vector<24x128xi32>
    %90 = arith.cmpi sge, %83, %89 : vector<24x128xi32>
    %91 = arith.andi %88, %90 : vector<24x128xi1>
    %c20_i32_35 = arith.constant 20 : i32
    %92 = vector.broadcast %c20_i32_35 : i32 to vector<24x128xi32>
    %93 = arith.cmpi slt, %83, %92 : vector<24x128xi32>
    %94 = arith.andi %91, %93 : vector<24x128xi1>
    %cst_36 = arith.constant 0.000000e+00 : f32
    %95 = vector.broadcast %cst_36 : f32 to vector<24x128xf32>
    %96 = arith.select %94, %81, %95 : vector<24x128xi1>, vector<24x128xf32>
    %c0_37 = arith.constant 0 : index
    %c0_38 = arith.constant 0 : index
    %c0_39 = arith.constant 0 : index
    %97 = vector.load %arg2[%c0_37, %c0_38, %c0_39] : memref<1x24x128xf32, #tpu.memory_space<vmem>>, vector<1x24x128xf32>
    %98 = vector.shape_cast %97 : vector<1x24x128xf32> to vector<24x128xf32>
    %99 = vector.shape_cast %96 : vector<24x128xf32> to vector<1x24x128xf32>
    tpu.vector_store %arg2[%c0_37, %c0_38, %c0_39], %99 {strides = array<i32>} : memref<1x24x128xf32, #tpu.memory_space<vmem>>, vector<1x24x128xf32>,
    %100 = math.absf %74 : vector<24x128xf32>
    %101 = math.absf %77 : vector<24x128xf32>
    %cst_40 = arith.constant 0.414213181 : f32
    %102 = vector.broadcast %cst_40 : f32 to vector<24x128xf32>
    %103 = arith.mulf %102, %100 : vector<24x128xf32>
    %104 = arith.cmpf olt, %101, %103 : vector<24x128xf32>
    %cst_41 = arith.constant 2.41420674 : f32
    %105 = vector.broadcast %cst_41 : f32 to vector<24x128xf32>
    %106 = arith.mulf %105, %100 : vector<24x128xf32>
    %107 = arith.cmpf oge, %101, %106 : vector<24x128xf32>
    %cst_42 = arith.constant 0.000000e+00 : f32
    %108 = vector.broadcast %cst_42 : f32 to vector<24x128xf32>
    %109 = arith.cmpf ogt, %74, %108 : vector<24x128xf32>
    %c4_i32_43 = arith.constant 4 : i32
    %c0_i32 = arith.constant 0 : i32
    %110 = vector.broadcast %c4_i32_43 : i32 to vector<24x128xi32>
    %111 = vector.broadcast %c0_i32 : i32 to vector<24x128xi32>
    %112 = arith.select %109, %110, %111 : vector<24x128xi1>, vector<24x128xi32>
    %cst_44 = arith.constant 0.000000e+00 : f32
    %113 = vector.broadcast %cst_44 : f32 to vector<24x128xf32>
    %114 = arith.cmpf ogt, %77, %113 : vector<24x128xf32>
    %cst_45 = arith.constant 0.000000e+00 : f32
    %115 = vector.broadcast %cst_45 : f32 to vector<24x128xf32>
    %116 = arith.cmpf olt, %77, %115 : vector<24x128xf32>
    %c2_i32_46 = arith.constant 2 : i32
    %c4_i32_47 = arith.constant 4 : i32
    %117 = vector.broadcast %c2_i32_46 : i32 to vector<24x128xi32>
    %118 = vector.broadcast %c4_i32_47 : i32 to vector<24x128xi32>
    %119 = arith.select %116, %117, %118 : vector<24x128xi1>, vector<24x128xi32>
    %c6_i32 = arith.constant 6 : i32
    %120 = vector.broadcast %c6_i32 : i32 to vector<24x128xi32>
    %121 = arith.select %114, %120, %119 : vector<24x128xi1>, vector<24x128xi32>
    %cst_48 = arith.constant 0.000000e+00 : f32
    %122 = vector.broadcast %cst_48 : f32 to vector<24x128xf32>
    %123 = arith.cmpf ogt, %74, %122 : vector<24x128xf32>
    %cst_49 = arith.constant 0.000000e+00 : f32
    %124 = vector.broadcast %cst_49 : f32 to vector<24x128xf32>
    %125 = arith.cmpf ogt, %77, %124 : vector<24x128xf32>
    %c5_i32 = arith.constant 5 : i32
    %c3_i32_50 = arith.constant 3 : i32
    %126 = vector.broadcast %c5_i32 : i32 to vector<24x128xi32>
    %127 = vector.broadcast %c3_i32_50 : i32 to vector<24x128xi32>
    %128 = arith.select %125, %126, %127 : vector<24x128xi1>, vector<24x128xi32>
    %cst_51 = arith.constant 0.000000e+00 : f32
    %129 = vector.broadcast %cst_51 : f32 to vector<24x128xf32>
    %130 = arith.cmpf ogt, %77, %129 : vector<24x128xf32>
    %c7_i32 = arith.constant 7 : i32
    %c1_i32_52 = arith.constant 1 : i32
    %131 = vector.broadcast %c7_i32 : i32 to vector<24x128xi32>
    %132 = vector.broadcast %c1_i32_52 : i32 to vector<24x128xi32>
    %133 = arith.select %130, %131, %132 : vector<24x128xi1>, vector<24x128xi32>
    %134 = arith.select %123, %128, %133 : vector<24x128xi1>, vector<24x128xi32>
    %135 = arith.select %107, %121, %134 : vector<24x128xi1>, vector<24x128xi32>
    %136 = arith.select %104, %112, %135 : vector<24x128xi1>, vector<24x128xi32>
    %c0_53 = arith.constant 0 : index
    %c0_54 = arith.constant 0 : index
    %c0_55 = arith.constant 0 : index
    %137 = vector.load %arg3[%c0_53, %c0_54, %c0_55] : memref<1x24x128xi32, #tpu.memory_space<vmem>>, vector<1x24x128xi32>
    %138 = vector.shape_cast %137 : vector<1x24x128xi32> to vector<24x128xi32>
    %139 = vector.shape_cast %136 : vector<24x128xi32> to vector<1x24x128xi32>
    tpu.vector_store %arg3[%c0_53, %c0_54, %c0_55], %139 {strides = array<i32>} : memref<1x24x128xi32, #tpu.memory_space<vmem>>, vector<1x24x128xi32>,
    return
  }
  func.func @transform_0(%arg0: i32) -> (i32, i32, i32, i32) {
    %c0_i32 = arith.constant 0 : i32
    %c0_i32_0 = arith.constant 0 : i32
    %c0_i32_1 = arith.constant 0 : i32
    %c0_i32_2 = arith.constant 0 : i32
    return %arg0, %c0_i32, %c0_i32_0, %c0_i32_1 : i32, i32, i32, i32
  }
  func.func @transform_1(%arg0: i32) -> (i32, i32, i32) {
    %c0_i32 = arith.constant 0 : i32
    %c0_i32_0 = arith.constant 0 : i32
    %c0_i32_1 = arith.constant 0 : i32
    return %arg0, %c0_i32, %c0_i32_0 : i32, i32, i32
  }
  func.func @transform_2(%arg0: i32) -> (i32, i32, i32) {
    %c0_i32 = arith.constant 0 : i32
    %c0_i32_0 = arith.constant 0 : i32
    %c0_i32_1 = arith.constant 0 : i32
    return %arg0, %c0_i32, %c0_i32_0 : i32, i32, i32
  }
}

module attributes {stable_mosaic.version = 11 : i64} {
  func.func @_nms_threshold_kernel(%arg0: i32, %arg1: memref<1x24x128xf32, #tpu.memory_space<vmem>>, %arg2: memref<1x24x128xi32, #tpu.memory_space<vmem>>, %arg3: memref<2xf32, #tpu.memory_space<smem>>, %arg4: memref<1x24x128xf32, #tpu.memory_space<vmem>>) attributes {dimension_semantics = [#tpu.dimension_semantics<parallel>], iteration_bounds = array<i64: 2>, scalar_prefetch = 0 : i64, scratch_operands = 0 : i64, tpu.core_type = #tpu.core_type<tc>, window_params = [{transform_indices = @transform_0, window_bounds = array<i64: 1, 24, 128>}, {transform_indices = @transform_1, window_bounds = array<i64: 1, 24, 128>}, {transform_indices = @transform_2, window_bounds = array<i64: 2>}, {transform_indices = @transform_3, window_bounds = array<i64: 1, 24, 128>}]} {
    %c0 = arith.constant 0 : index
    %c0_0 = arith.constant 0 : index
    %c0_1 = arith.constant 0 : index
    %0 = vector.load %arg1[%c0, %c0_0, %c0_1] : memref<1x24x128xf32, #tpu.memory_space<vmem>>, vector<1x24x128xf32>
    %1 = vector.shape_cast %0 : vector<1x24x128xf32> to vector<24x128xf32>
    %c0_2 = arith.constant 0 : index
    %c0_3 = arith.constant 0 : index
    %c0_4 = arith.constant 0 : index
    %2 = vector.load %arg2[%c0_2, %c0_3, %c0_4] : memref<1x24x128xi32, #tpu.memory_space<vmem>>, vector<1x24x128xi32>
    %3 = vector.shape_cast %2 : vector<1x24x128xi32> to vector<24x128xi32>
    %c1_i32 = arith.constant 1 : i32
    %4 = tpu.dynamic_rotate %1 by %c1_i32 dim 0 : vector<24x128xf32>, i32 -> vector<24x128xf32>
    %c23_i32 = arith.constant 23 : i32
    %5 = tpu.dynamic_rotate %1 by %c23_i32 dim 0 : vector<24x128xf32>, i32 -> vector<24x128xf32>
    %cst = arith.constant 0.000000e+00 : f32
    %6 = vector.broadcast %cst : f32 to vector<24x128xf32>
    %cst_5 = arith.constant 0.000000e+00 : f32
    %7 = vector.broadcast %cst_5 : f32 to vector<24x128xf32>
    %c1_i32_6 = arith.constant 1 : i32
    %8 = tpu.dynamic_rotate %4 by %c1_i32_6 dim 1 : vector<24x128xf32>, i32 -> vector<24x128xf32>
    %9 = arith.subf %1, %8 : vector<24x128xf32>
    %c0_i32 = arith.constant 0 : i32
    %10 = vector.broadcast %c0_i32 : i32 to vector<24x128xi32>
    %11 = arith.cmpi eq, %3, %10 : vector<24x128xi32>
    %12 = arith.select %11, %9, %6 : vector<24x128xi1>, vector<24x128xf32>
    %c4_i32 = arith.constant 4 : i32
    %13 = vector.broadcast %c4_i32 : i32 to vector<24x128xi32>
    %14 = arith.cmpi eq, %3, %13 : vector<24x128xi32>
    %15 = arith.select %14, %9, %7 : vector<24x128xi1>, vector<24x128xf32>
    %16 = arith.subf %1, %4 : vector<24x128xf32>
    %c1_i32_7 = arith.constant 1 : i32
    %17 = vector.broadcast %c1_i32_7 : i32 to vector<24x128xi32>
    %18 = arith.cmpi eq, %3, %17 : vector<24x128xi32>
    %19 = arith.select %18, %16, %12 : vector<24x128xi1>, vector<24x128xf32>
    %c5_i32 = arith.constant 5 : i32
    %20 = vector.broadcast %c5_i32 : i32 to vector<24x128xi32>
    %21 = arith.cmpi eq, %3, %20 : vector<24x128xi32>
    %22 = arith.select %21, %16, %15 : vector<24x128xi1>, vector<24x128xf32>
    %c127_i32 = arith.constant 127 : i32
    %23 = tpu.dynamic_rotate %4 by %c127_i32 dim 1 : vector<24x128xf32>, i32 -> vector<24x128xf32>
    %24 = arith.subf %1, %23 : vector<24x128xf32>
    %c2_i32 = arith.constant 2 : i32
    %25 = vector.broadcast %c2_i32 : i32 to vector<24x128xi32>
    %26 = arith.cmpi eq, %3, %25 : vector<24x128xi32>
    %27 = arith.select %26, %24, %19 : vector<24x128xi1>, vector<24x128xf32>
    %c6_i32 = arith.constant 6 : i32
    %28 = vector.broadcast %c6_i32 : i32 to vector<24x128xi32>
    %29 = arith.cmpi eq, %3, %28 : vector<24x128xi32>
    %30 = arith.select %29, %24, %22 : vector<24x128xi1>, vector<24x128xf32>
    %c1_i32_8 = arith.constant 1 : i32
    %31 = tpu.dynamic_rotate %1 by %c1_i32_8 dim 1 : vector<24x128xf32>, i32 -> vector<24x128xf32>
    %32 = arith.subf %1, %31 : vector<24x128xf32>
    %c3_i32 = arith.constant 3 : i32
    %33 = vector.broadcast %c3_i32 : i32 to vector<24x128xi32>
    %34 = arith.cmpi eq, %3, %33 : vector<24x128xi32>
    %35 = arith.select %34, %32, %27 : vector<24x128xi1>, vector<24x128xf32>
    %c7_i32 = arith.constant 7 : i32
    %36 = vector.broadcast %c7_i32 : i32 to vector<24x128xi32>
    %37 = arith.cmpi eq, %3, %36 : vector<24x128xi32>
    %38 = arith.select %37, %32, %30 : vector<24x128xi1>, vector<24x128xf32>
    %c127_i32_9 = arith.constant 127 : i32
    %39 = tpu.dynamic_rotate %5 by %c127_i32_9 dim 1 : vector<24x128xf32>, i32 -> vector<24x128xf32>
    %40 = arith.subf %1, %39 : vector<24x128xf32>
    %c4_i32_10 = arith.constant 4 : i32
    %41 = vector.broadcast %c4_i32_10 : i32 to vector<24x128xi32>
    %42 = arith.cmpi eq, %3, %41 : vector<24x128xi32>
    %43 = arith.select %42, %40, %35 : vector<24x128xi1>, vector<24x128xf32>
    %c0_i32_11 = arith.constant 0 : i32
    %44 = vector.broadcast %c0_i32_11 : i32 to vector<24x128xi32>
    %45 = arith.cmpi eq, %3, %44 : vector<24x128xi32>
    %46 = arith.select %45, %40, %38 : vector<24x128xi1>, vector<24x128xf32>
    %c127_i32_12 = arith.constant 127 : i32
    %47 = tpu.dynamic_rotate %1 by %c127_i32_12 dim 1 : vector<24x128xf32>, i32 -> vector<24x128xf32>
    %48 = arith.subf %1, %47 : vector<24x128xf32>
    %c5_i32_13 = arith.constant 5 : i32
    %49 = vector.broadcast %c5_i32_13 : i32 to vector<24x128xi32>
    %50 = arith.cmpi eq, %3, %49 : vector<24x128xi32>
    %51 = arith.select %50, %48, %43 : vector<24x128xi1>, vector<24x128xf32>
    %c1_i32_14 = arith.constant 1 : i32
    %52 = vector.broadcast %c1_i32_14 : i32 to vector<24x128xi32>
    %53 = arith.cmpi eq, %3, %52 : vector<24x128xi32>
    %54 = arith.select %53, %48, %46 : vector<24x128xi1>, vector<24x128xf32>
    %c1_i32_15 = arith.constant 1 : i32
    %55 = tpu.dynamic_rotate %5 by %c1_i32_15 dim 1 : vector<24x128xf32>, i32 -> vector<24x128xf32>
    %56 = arith.subf %1, %55 : vector<24x128xf32>
    %c6_i32_16 = arith.constant 6 : i32
    %57 = vector.broadcast %c6_i32_16 : i32 to vector<24x128xi32>
    %58 = arith.cmpi eq, %3, %57 : vector<24x128xi32>
    %59 = arith.select %58, %56, %51 : vector<24x128xi1>, vector<24x128xf32>
    %c2_i32_17 = arith.constant 2 : i32
    %60 = vector.broadcast %c2_i32_17 : i32 to vector<24x128xi32>
    %61 = arith.cmpi eq, %3, %60 : vector<24x128xi32>
    %62 = arith.select %61, %56, %54 : vector<24x128xi1>, vector<24x128xf32>
    %63 = arith.subf %1, %5 : vector<24x128xf32>
    %c7_i32_18 = arith.constant 7 : i32
    %64 = vector.broadcast %c7_i32_18 : i32 to vector<24x128xi32>
    %65 = arith.cmpi eq, %3, %64 : vector<24x128xi32>
    %66 = arith.select %65, %63, %59 : vector<24x128xi1>, vector<24x128xf32>
    %c3_i32_19 = arith.constant 3 : i32
    %67 = vector.broadcast %c3_i32_19 : i32 to vector<24x128xi32>
    %68 = arith.cmpi eq, %3, %67 : vector<24x128xi32>
    %69 = arith.select %68, %63, %62 : vector<24x128xi1>, vector<24x128xf32>
    %70 = arith.minimumf %66, %69 : vector<24x128xf32>
    %cst_20 = arith.constant 0.000000e+00 : f32
    %71 = vector.broadcast %cst_20 : f32 to vector<24x128xf32>
    %72 = arith.cmpf ogt, %70, %71 : vector<24x128xf32>
    %cst_21 = arith.constant 0.000000e+00 : f32
    %73 = vector.broadcast %cst_21 : f32 to vector<24x128xf32>
    %74 = arith.select %72, %1, %73 : vector<24x128xi1>, vector<24x128xf32>
    %75 = arith.index_cast %arg0 : i32 to index
    %76 = memref.load %arg3[%75] : memref<2xf32, #tpu.memory_space<smem>>
    %77 = vector.broadcast %76 : f32 to vector<24x128xf32>
    %78 = arith.cmpf olt, %74, %77 : vector<24x128xf32>
    %cst_22 = arith.constant 0.000000e+00 : f32
    %79 = vector.broadcast %cst_22 : f32 to vector<24x128xf32>
    %80 = arith.select %78, %79, %74 : vector<24x128xi1>, vector<24x128xf32>
    %c0_23 = arith.constant 0 : index
    %c0_24 = arith.constant 0 : index
    %c0_25 = arith.constant 0 : index
    %81 = vector.load %arg4[%c0_23, %c0_24, %c0_25] : memref<1x24x128xf32, #tpu.memory_space<vmem>>, vector<1x24x128xf32>
    %82 = vector.shape_cast %81 : vector<1x24x128xf32> to vector<24x128xf32>
    %83 = vector.shape_cast %80 : vector<24x128xf32> to vector<1x24x128xf32>
    tpu.vector_store %arg4[%c0_23, %c0_24, %c0_25], %83 {strides = array<i32>} : memref<1x24x128xf32, #tpu.memory_space<vmem>>, vector<1x24x128xf32>,
    return
  }
  func.func @transform_0(%arg0: i32) -> (i32, i32, i32) {
    %c0_i32 = arith.constant 0 : i32
    %c0_i32_0 = arith.constant 0 : i32
    %c0_i32_1 = arith.constant 0 : i32
    return %arg0, %c0_i32, %c0_i32_0 : i32, i32, i32
  }
  func.func @transform_1(%arg0: i32) -> (i32, i32, i32) {
    %c0_i32 = arith.constant 0 : i32
    %c0_i32_0 = arith.constant 0 : i32
    %c0_i32_1 = arith.constant 0 : i32
    %c0_i32_2 = arith.constant 0 : i32
    return %c0_i32, %c0_i32_0, %c0_i32_1 : i32, i32, i32
  }
  func.func @transform_2(%arg0: i32) -> i32 {
    %c0_i32 = arith.constant 0 : i32
    %c0_i32_0 = arith.constant 0 : i32
    return %c0_i32 : i32
  }
  func.func @transform_3(%arg0: i32) -> (i32, i32, i32) {
    %c0_i32 = arith.constant 0 : i32
    %c0_i32_0 = arith.constant 0 : i32
    %c0_i32_1 = arith.constant 0 : i32
    return %arg0, %c0_i32, %c0_i32_0 : i32, i32, i32
  }
}

</mosaic_0001>

<llo_original>
// kernel: canny_forward.3
$region0: #{canny_forward.3}
  #allocation0 [shape = 'u32[]', space=smem, size = 0x4, offset = 0x4, fixed_abs, tag = 'smem constant byte address 0x4 - core index']
  #allocation1 [shape = 'u32[144,128]{1,0:T(1,128)}', space=vmem, size = 0x12000, scoped, tag = 'internal scratch']
  %s0 = inlined_call_operand.vmem [shape: f32[2,24,128], index: 0, kind: input, shape index: {}]
  %s1 = inlined_call_operand.vmem [shape: s32[2,24,128], index: 1, kind: input, shape index: {}]
  %s2 = inlined_call_operand.vmem [shape: f32[2], index: 2, kind: input, shape index: {}]
  %s3 = inlined_call_operand.vmem [shape: f32[2,24,128], index: 3, kind: output, shape index: {}]
  %s4 = sld [smem:[#allocation0]]
  $region49: #{canny_forward.3} parent=0
    _
  %s6 = ssub.s32 1, %s4
  %s7 = scalar_select 0, %s6, %s4
  $region1: #{canny_forward.3} parent=0
    #allocation2 [shape = 'u8[512]{0}', space=smem, size = 0x200, scoped, tag = 'input window, operand 2, single buffered']
    #allocation3 [shape = 's32[2]{0}', space=sflag, size = 0x8, scoped, tag = 'scoped memory for canny_forward.3']
    %8 = vsyncpa [#allocation3], 0
    loop: start=0, step=1, limit=4
    $region2: #{canny_forward.3} parent=1 // loop_pre_header
      _
    $region3: #{canny_forward.3} parent=1 // loop_header
      %s10 = sphi 0, %s14
      %p11 = scmp.ge.s32.totalorder %s10, 4
      %s20 = sphi 0, %s22
      %s23 = sphi 0, %s20
      %s24 = sphi 0, %s23
      %s40 = sphi 0, %s24
      %s44 = sphi 0, %s44
      %s46 = sphi 0, %s44
      %s47 = sphi 0, %s46
      %s61 = sphi 0, %s47
      %s65 = sphi 0, %s65
      %s67 = sphi 0, %s65
      %s68 = sphi 0, %s67
      %s82 = sphi 0, %s68
      %s88 = sphi 0, %s90
      %s91 = sphi 0, %s88
      %s92 = sphi 0, %s91
      %s108 = sphi 0, %s92
    $region4: #{canny_forward.3} parent=1 // loop_header_branch
      %13 = sbr.rel (%p11) target = $region8
    $region5: #{canny_forward.3} parent=1 // loop_body
      %s15 = ssub.s32 %s10, 1
      %s16 = ssub.s32 %s10, 2
      %s17 = sadd.s32 %s10, 1
      %s18 = ssub.s32 %s10, %s17
      %p19 = scmp.eq.s32.totalorder %s18, 0
      %s21 = sadd.s32 %s20, 1
      %s22 = scalar_select %p19, %s20, %s21
      %p25 = pneg %p19
      %p26 = scmp.eq.s32.totalorder %s10, 1
      %p27 = por %p25, %p26
      %p28 = scmp.ne.s32.totalorder %s20, %s23
      %p29 = scmp.eq.s32.totalorder %s10, 0
      %p30 = por %p28, %p29
      %p31 = scmp.ne.s32.totalorder %s20, %s23
      %p32 = scmp.eq.s32.totalorder %s15, 1
      %p33 = por %p31, %p32
      %p34 = scmp.ne.s32.totalorder %s23, %s24
      %p35 = scmp.eq.s32.totalorder %s15, 0
      %p36 = por %p34, %p35
      %p37 = scmp.ne.s32.totalorder %s23, %s24
      %p38 = scmp.eq.s32.totalorder %s16, 1
      %p39 = por %p37, %p38
      %p41 = scmp.ne.s32.totalorder %s24, %s40
      %p42 = scmp.eq.s32.totalorder %s16, 0
      %p43 = por %p41, %p42
      %s45 = sadd.s32 %s44, 1
      %p48 = scmp.eq.s32.totalorder %s10, 1
      %p49 = scmp.ne.s32.totalorder %s44, %s46
      %p50 = scmp.eq.s32.totalorder %s10, 0
      %p51 = por %p49, %p50
      %p52 = scmp.ne.s32.totalorder %s44, %s46
      %p53 = scmp.eq.s32.totalorder %s15, 1
      %p54 = por %p52, %p53
      %p55 = scmp.ne.s32.totalorder %s46, %s47
      %p56 = scmp.eq.s32.totalorder %s15, 0
      %p57 = por %p55, %p56
      %p58 = scmp.ne.s32.totalorder %s46, %s47
      %p59 = scmp.eq.s32.totalorder %s16, 1
      %p60 = por %p58, %p59
      %p62 = scmp.ne.s32.totalorder %s47, %s61
      %p63 = scmp.eq.s32.totalorder %s16, 0
      %p64 = por %p62, %p63
      %s66 = sadd.s32 %s65, 1
      %p69 = scmp.eq.s32.totalorder %s10, 1
      %p70 = scmp.ne.s32.totalorder %s65, %s67
      %p71 = scmp.eq.s32.totalorder %s10, 0
      %p72 = por %p70, %p71
      %p73 = scmp.ne.s32.totalorder %s65, %s67
      %p74 = scmp.eq.s32.totalorder %s15, 1
      %p75 = por %p73, %p74
      %p76 = scmp.ne.s32.totalorder %s67, %s68
      %p77 = scmp.eq.s32.totalorder %s15, 0
      %p78 = por %p76, %p77
      %p79 = scmp.ne.s32.totalorder %s67, %s68
      %p80 = scmp.eq.s32.totalorder %s16, 1
      %p81 = por %p79, %p80
      %p83 = scmp.ne.s32.totalorder %s68, %s82
      %p84 = scmp.eq.s32.totalorder %s16, 0
      %p85 = por %p83, %p84
      %s86 = ssub.s32 %s10, %s17
      %p87 = scmp.eq.s32.totalorder %s86, 0
      %s89 = sadd.s32 %s88, 1
      %s90 = scalar_select %p87, %s88, %s89
      %p93 = pneg %p87
      %p94 = scmp.eq.s32.totalorder %s10, 1
      %p95 = por %p93, %p94
      %p96 = scmp.ne.s32.totalorder %s88, %s91
      %p97 = scmp.eq.s32.totalorder %s10, 0
      %p98 = por %p96, %p97
      %p99 = scmp.ne.s32.totalorder %s88, %s91
      %p100 = scmp.eq.s32.totalorder %s15, 1
      %p101 = por %p99, %p100
      %p102 = scmp.ne.s32.totalorder %s91, %s92
      %p103 = scmp.eq.s32.totalorder %s15, 0
      %p104 = por %p102, %p103
      %p105 = scmp.ne.s32.totalorder %s91, %s92
      %p106 = scmp.eq.s32.totalorder %s16, 1
      %p107 = por %p105, %p106
      %p109 = scmp.ne.s32.totalorder %s92, %s108
      %p110 = scmp.eq.s32.totalorder %s16, 0
      %p111 = por %p109, %p110
      %p112 = scmp.le.s32.totalorder 1, %s10
      %p113 = scmp.lt.s32.totalorder %s10, 3
      %p114 = pnand %p112, %p113
      %p115 = pneg %p114
      // Predicated region
      $region9: #{canny_forward.3} parent=5 // pred_check
        _
      $region10: #{canny_forward.3} parent=5 // pred_check_branch
        %117 = sbr.rel (%p114) target = $region12
      $region11: #{canny_forward.3} parent=5 // pred_region
        %s118 = ssub.s32 %s10, 1
        // Predicated region
        $region13: #{canny_forward.3} parent=11 // pred_check
          %p119 = pneg %p57
        $region14: #{canny_forward.3} parent=11 // pred_check_branch
          %121 = sbr.rel (%p119) target = $region16
        $region15: #{canny_forward.3} parent=11 // pred_region
          _
        $region16: #{canny_forward.3} parent=11 // pred_fallthru
          _
        // Predicated region
        $region17: #{canny_forward.3} parent=11 // pred_check
          %p122 = pneg %p78
        $region18: #{canny_forward.3} parent=11 // pred_check_branch
          %124 = sbr.rel (%p122) target = $region20
        $region19: #{canny_forward.3} parent=11 // pred_region
          %s126 = ssub.s32 16, 16
          %127 = vsyncadd [#allocation3], %s126
          %s129 = sshll.u32 %s2, 4
          %s130 = int_to_ptr.vmem [resolvable:$true] %s129
          %132 = dma.vmem_to_smem %s130, 16, [#allocation2], [#allocation3]
        $region20: #{canny_forward.3} parent=11 // pred_fallthru
          _
      $region12: #{canny_forward.3} parent=5 // pred_fallthru
        _
      %p133 = scmp.lt.s32.totalorder %s10, 2
      // Predicated region
      $region21: #{canny_forward.3} parent=5 // pred_check
        %p134 = pneg %p133
      $region22: #{canny_forward.3} parent=5 // pred_check_branch
        %136 = sbr.rel (%p134) target = $region24
      $region23: #{canny_forward.3} parent=5 // pred_region
        // Predicated region
        $region25: #{canny_forward.3} parent=23 // pred_check
          %p137 = pneg %p30
        $region26: #{canny_forward.3} parent=23 // pred_check_branch
          %139 = sbr.rel (%p137) target = $region28
        $region27: #{canny_forward.3} parent=23 // pred_region
          %p140 = scmp.lt.s32.totalorder %s10, 1
          %s141 = scalar_select %p140, %s10, 1
          %s142 = smul.addr %s141, 3
          %s143 = smul.addr %s142, 8
          %s144 = scalar_lea.vmem %s0, %s143
        $region28: #{canny_forward.3} parent=23 // pred_fallthru
          _
      $region24: #{canny_forward.3} parent=5 // pred_fallthru
        _
      %p145 = scmp.le.s32.totalorder 1, %s10
      %p146 = scmp.lt.s32.totalorder %s10, 3
      %p147 = pnand %p145, %p146
      %p148 = pneg %p147
      // Predicated region
      $region29: #{canny_forward.3} parent=5 // pred_check
        _
      $region30: #{canny_forward.3} parent=5 // pred_check_branch
        %150 = sbr.rel (%p147) target = $region32
      $region31: #{canny_forward.3} parent=5 // pred_region
        %s151 = ssub.s32 %s10, 1
        // Predicated region
        $region33: #{canny_forward.3} parent=31 // pred_check
          %p152 = pneg %p78
        $region34: #{canny_forward.3} parent=31 // pred_check_branch
          %154 = sbr.rel (%p152) target = $region36
        $region35: #{canny_forward.3} parent=31 // pred_region
          %155 = dma.done [#allocation3], 16
        $region36: #{canny_forward.3} parent=31 // pred_fallthru
          _
        %156 = sfence
        %p157 = scmp.lt.s32.totalorder %s15, 1
        %s158 = scalar_select %p157, %s15, 1
        %s159 = smul.addr %s158, 3
        %s160 = smul.addr %s159, 8
        %s161 = scalar_lea.vmem %s0, %s160
        %p162 = pneg %p36
        %p163 = pneg %p33
        %p164 = pneg %p57
        %p165 = pneg %p54
        %p166 = pneg %p78
        %p167 = pneg %p75
        %p168 = pneg %p104
        %p169 = pneg %p101
        %p170 = scmp.lt.s32.totalorder %s15, 1
        %s171 = scalar_select %p170, %s15, 1
        %s172 = smul.addr %s171, 3
        %s173 = smul.addr %s172, 8
        %s174 = scalar_lea.vmem %s3, %s173
        %p175 = scmp.lt.s32.totalorder %s15, 1
        %s176 = scalar_select %p175, %s15, 1
        %s177 = smul.addr %s176, 3
        %s178 = smul.addr %s177, 8
        %s179 = scalar_lea.vmem %s0, %s178
        %p180 = scmp.lt.s32.totalorder %s15, 1
        %s181 = scalar_select %p180, %s15, 1
        %s182 = smul.addr %s181, 3
        %s183 = smul.addr %s182, 8
        %s184 = scalar_lea.vmem %s3, %s183
        %v185 = vld [vmem:[%s179] sm:$0xff]
        %v186 = vld [vmem:[%s179 + $0x8] sm:$0xff]
        %v187 = vld [vmem:[%s179 + $0x10] sm:$0xff]
        %v188 = vld [vmem:[%s1] sm:$0xff]
        %v189 = vld [vmem:[%s1 + $0x8] sm:$0xff]
        %v190 = vld [vmem:[%s1 + $0x10] sm:$0xff]
        %v191 = vrot.slane %v185, 7
        %v192 = vrot.slane %v186, 7
        %v193 = vrot.slane %v187, 7
        %v194 = vlaneseq
        %v195 = vshrl.u32 %v194, 7
        %vm196 = vcmp.lt.s32.totalorder %v195, 1
        %v197 = vsel %vm196, %v192, %v193
        %v198 = vsel %vm196, %v191, %v192
        %v199 = vsel %vm196, %v193, %v191
        %v200 = vrot.slane %v185, 1
        %v201 = vrot.slane %v186, 1
        %v202 = vrot.slane %v187, 1
        %vm203 = vcmp.lt.s32.totalorder %v195, 7
        %v204 = vsel %vm203, %v201, %v202
        %v205 = vsel %vm203, %v200, %v201
        %v206 = vsel %vm203, %v202, %v200
        %207 = vrot.lane.b32.xlu0 %v199, 1
        %v208 = vpop.permute.xlu0 %207
        %209 = vrot.lane.b32.xlu0 %v198, 1
        %v210 = vpop.permute.xlu0 %209
        %211 = vrot.lane.b32.xlu0 %v197, 1
        %v212 = vpop.permute.xlu0 %211
        %v213 = vsub.f32 %v185, %v208
        %v214 = vsub.f32 %v186, %v210
        %v215 = vsub.f32 %v187, %v212
        %vm216 = vcmp.eq.s32.totalorder %v188, 0
        %vm217 = vcmp.eq.s32.totalorder %v189, 0
        %vm218 = vcmp.eq.s32.totalorder %v190, 0
        %v219 = vsel %vm216, %v213, 0.0
        %v220 = vsel %vm217, %v214, 0.0
        %v221 = vsel %vm218, %v215, 0.0
        %vm222 = vcmp.eq.s32.totalorder %v188, 4
        %vm223 = vcmp.eq.s32.totalorder %v189, 4
        %vm224 = vcmp.eq.s32.totalorder %v190, 4
        %v225 = vsel %vm222, %v213, 0.0
        %v226 = vsel %vm223, %v214, 0.0
        %v227 = vsel %vm224, %v215, 0.0
        %v228 = vsub.f32 %v185, %v199
        %v229 = vsub.f32 %v186, %v198
        %v230 = vsub.f32 %v187, %v197
        %vm231 = vcmp.eq.s32.totalorder %v188, 1
        %vm232 = vcmp.eq.s32.totalorder %v189, 1
        %vm233 = vcmp.eq.s32.totalorder %v190, 1
        %v234 = vsel %vm231, %v228, %v219
        %v235 = vsel %vm232, %v229, %v220
        %v236 = vsel %vm233, %v230, %v221
        %vm237 = vcmp.eq.s32.totalorder %v188, 5
        %vm238 = vcmp.eq.s32.totalorder %v189, 5
        %vm239 = vcmp.eq.s32.totalorder %v190, 5
        %v240 = vsel %vm237, %v228, %v225
        %v241 = vsel %vm238, %v229, %v226
        %v242 = vsel %vm239, %v230, %v227
        %243 = vrot.lane.b32.xlu0 %v199, 127
        %v244 = vpop.permute.xlu0 %243
        %245 = vrot.lane.b32.xlu0 %v198, 127
        %v246 = vpop.permute.xlu0 %245
        %247 = vrot.lane.b32.xlu0 %v197, 127
        %v248 = vpop.permute.xlu0 %247
        %v249 = vsub.f32 %v185, %v244
        %v250 = vsub.f32 %v186, %v246
        %v251 = vsub.f32 %v187, %v248
        %vm252 = vcmp.eq.s32.totalorder %v188, 2
        %vm253 = vcmp.eq.s32.totalorder %v189, 2
        %vm254 = vcmp.eq.s32.totalorder %v190, 2
        %v255 = vsel %vm252, %v249, %v234
        %v256 = vsel %vm253, %v250, %v235
        %v257 = vsel %vm254, %v251, %v236
        %vm258 = vcmp.eq.s32.totalorder %v188, 6
        %vm259 = vcmp.eq.s32.totalorder %v189, 6
        %vm260 = vcmp.eq.s32.totalorder %v190, 6
        %v261 = vsel %vm258, %v249, %v240
        %v262 = vsel %vm259, %v250, %v241
        %v263 = vsel %vm260, %v251, %v242
        %264 = vrot.lane.b32.xlu0 %v185, 1
        %v265 = vpop.permute.xlu0 %264
        %266 = vrot.lane.b32.xlu0 %v186, 1
        %v267 = vpop.permute.xlu0 %266
        %268 = vrot.lane.b32.xlu0 %v187, 1
        %v269 = vpop.permute.xlu0 %268
        %v270 = vsub.f32 %v185, %v265
        %v271 = vsub.f32 %v186, %v267
        %v272 = vsub.f32 %v187, %v269
        %vm273 = vcmp.eq.s32.totalorder %v188, 3
        %vm274 = vcmp.eq.s32.totalorder %v189, 3
        %vm275 = vcmp.eq.s32.totalorder %v190, 3
        %v276 = vsel %vm273, %v270, %v255
        %v277 = vsel %vm274, %v271, %v256
        %v278 = vsel %vm275, %v272, %v257
        %vm279 = vcmp.eq.s32.totalorder %v188, 7
        %vm280 = vcmp.eq.s32.totalorder %v189, 7
        %vm281 = vcmp.eq.s32.totalorder %v190, 7
        %v282 = vsel %vm279, %v270, %v261
        %v283 = vsel %vm280, %v271, %v262
        %v284 = vsel %vm281, %v272, %v263
        %285 = vrot.lane.b32.xlu0 %v205, 127
        %v286 = vpop.permute.xlu0 %285
        %287 = vrot.lane.b32.xlu0 %v204, 127
        %v288 = vpop.permute.xlu0 %287
        %289 = vrot.lane.b32.xlu0 %v206, 127
        %v290 = vpop.permute.xlu0 %289
        %v291 = vsub.f32 %v185, %v286
        %v292 = vsub.f32 %v186, %v288
        %v293 = vsub.f32 %v187, %v290
        %v294 = vsel %vm222, %v291, %v276
        %v295 = vsel %vm223, %v292, %v277
        %v296 = vsel %vm224, %v293, %v278
        %v297 = vsel %vm216, %v291, %v282
        %v298 = vsel %vm217, %v292, %v283
        %v299 = vsel %vm218, %v293, %v284
        %300 = vrot.lane.b32.xlu0 %v185, 127
        %v301 = vpop.permute.xlu0 %300
        %302 = vrot.lane.b32.xlu0 %v186, 127
        %v303 = vpop.permute.xlu0 %302
        %304 = vrot.lane.b32.xlu0 %v187, 127
        %v305 = vpop.permute.xlu0 %304
        %v306 = vsub.f32 %v185, %v301
        %v307 = vsub.f32 %v186, %v303
        %v308 = vsub.f32 %v187, %v305
        %v309 = vsel %vm237, %v306, %v294
        %v310 = vsel %vm238, %v307, %v295
        %v311 = vsel %vm239, %v308, %v296
        %v312 = vsel %vm231, %v306, %v297
        %v313 = vsel %vm232, %v307, %v298
        %v314 = vsel %vm233, %v308, %v299
        %315 = vrot.lane.b32.xlu0 %v205, 1
        %v316 = vpop.permute.xlu0 %315
        %317 = vrot.lane.b32.xlu0 %v204, 1
        %v318 = vpop.permute.xlu0 %317
        %319 = vrot.lane.b32.xlu0 %v206, 1
        %v320 = vpop.permute.xlu0 %319
        %v321 = vsub.f32 %v185, %v316
        %v322 = vsub.f32 %v186, %v318
        %v323 = vsub.f32 %v187, %v320
        %v324 = vsel %vm258, %v321, %v309
        %v325 = vsel %vm259, %v322, %v310
        %v326 = vsel %vm260, %v323, %v311
        %v327 = vsel %vm252, %v321, %v312
        %v328 = vsel %vm253, %v322, %v313
        %v329 = vsel %vm254, %v323, %v314
        %v330 = vsub.f32 %v185, %v205
        %v331 = vsub.f32 %v186, %v204
        %v332 = vsub.f32 %v187, %v206
        %v333 = vsel %vm279, %v330, %v324
        %v334 = vsel %vm280, %v331, %v325
        %v335 = vsel %vm281, %v332, %v326
        %v336 = vsel %vm273, %v330, %v327
        %v337 = vsel %vm274, %v331, %v328
        %v338 = vsel %vm275, %v332, %v329
        %v339 = vmin.f32 %v333, %v336
        %v340 = vmin.f32 %v334, %v337
        %v341 = vmin.f32 %v335, %v338
        %vm342 = vcmp.gt.f32.partialorder %v339, 0.0
        %vm343 = vcmp.gt.f32.partialorder %v340, 0.0
        %vm344 = vcmp.gt.f32.partialorder %v341, 0.0
        %v345 = vsel %vm342, %v185, 0.0
        %v346 = vsel %vm343, %v186, 0.0
        %v347 = vsel %vm344, %v187, 0.0
        %s348 = sld [smem:[#allocation2 + %s15]]
        %v349 = vstv %s348
        %vm350 = vcmp.lt.f32.partialorder %v345, %v349
        %vm351 = vcmp.lt.f32.partialorder %v346, %v349
        %vm352 = vcmp.lt.f32.partialorder %v347, %v349
        %v353 = vsel %vm350, 0.0, %v345
        %v354 = vsel %vm351, 0.0, %v346
        %v355 = vsel %vm352, 0.0, %v347
        %356 = vst [vmem:[%s184] sm:$0xff] %v353
        %357 = vst [vmem:[%s184 + $0x8] sm:$0xff] %v354
        %358 = vst [vmem:[%s184 + $0x10] sm:$0xff] %v355
        %p359 = scmp.lt.s32.totalorder %s15, 1
        %s360 = scalar_select %p359, %s15, 1
        %s361 = smul.addr %s360, 3
        %s362 = smul.addr %s361, 8
        %s363 = scalar_lea.vmem %s3, %s362
        // Predicated region
        $region37: #{canny_forward.3} parent=31 // pred_check
          %p364 = pneg %p101
        $region38: #{canny_forward.3} parent=31 // pred_check_branch
          %366 = sbr.rel (%p364) target = $region40
        $region39: #{canny_forward.3} parent=31 // pred_region
          _
        $region40: #{canny_forward.3} parent=31 // pred_fallthru
          _
      $region32: #{canny_forward.3} parent=5 // pred_fallthru
        _
      %p367 = scmp.le.s32.totalorder 2, %s10
      // Predicated region
      $region41: #{canny_forward.3} parent=5 // pred_check
        %p368 = pneg %p367
      $region42: #{canny_forward.3} parent=5 // pred_check_branch
        %370 = sbr.rel (%p368) target = $region44
      $region43: #{canny_forward.3} parent=5 // pred_region
        %s371 = ssub.s32 %s10, 2
        // Predicated region
        $region45: #{canny_forward.3} parent=43 // pred_check
          %p372 = pneg %p107
        $region46: #{canny_forward.3} parent=43 // pred_check_branch
          %374 = sbr.rel (%p372) target = $region48
        $region47: #{canny_forward.3} parent=43 // pred_region
          %p375 = scmp.lt.s32.totalorder %s16, 1
          %s376 = scalar_select %p375, %s16, 1
          %s377 = smul.addr %s376, 3
          %s378 = smul.addr %s377, 8
          %s379 = scalar_lea.vmem %s3, %s378
        $region48: #{canny_forward.3} parent=43 // pred_fallthru
          _
      $region44: #{canny_forward.3} parent=5 // pred_fallthru
        _
    $region6: #{canny_forward.3} parent=1 // loop_footer
      %s14 = sadd.s32 1, %s10
    $region7: #{canny_forward.3} parent=1 // loop_footer_branch
      %9 = sbr.rel target = $region3
    $region8: #{canny_forward.3} parent=1 // loop_exit
      _
    %380 = vsyncpa [#allocation3], 1
    %s381 = scalar_lea.sflag [#allocation3], 1
    %382 = vsyncpa %s381, 1

// kernel: canny_forward.2
$region0: #{canny_forward.2}
  #allocation0 [shape = 'u32[]', space=smem, size = 0x4, offset = 0x4, fixed_abs, tag = 'smem constant byte address 0x4 - core index']
  #allocation1 [shape = 'u32[144,128]{1,0:T(1,128)}', space=vmem, size = 0x12000, scoped, tag = 'internal scratch']
  %s0 = inlined_call_operand.vmem [shape: f32[2,3,24,128], index: 0, kind: input, shape index: {}]
  %s1 = inlined_call_operand.vmem [shape: f32[2,24,128], index: 1, kind: output, shape index: {0}]
  %s2 = inlined_call_operand.vmem [shape: s32[2,24,128], index: 2, kind: output, shape index: {1}]
  %3 = xla_tuple %s1, %s2
  %s4 = sld [smem:[#allocation0]]
  $region45: #{canny_forward.2} parent=0
    _
  %s6 = ssub.s32 1, %s4
  %s7 = scalar_select 0, %s6, %s4
  loop: start=0, step=1, limit=4
  $region2: #{canny_forward.2} parent=0 // loop_pre_header
    _
  $region3: #{canny_forward.2} parent=0 // loop_header
    %s9 = sphi 0, %s13
    %p10 = scmp.ge.s32.totalorder %s9, 4
    %s19 = sphi 0, %s21
    %s22 = sphi 0, %s19
    %s23 = sphi 0, %s22
    %s39 = sphi 0, %s23
    %s45 = sphi 0, %s47
    %s48 = sphi 0, %s45
    %s49 = sphi 0, %s48
    %s65 = sphi 0, %s49
    %s71 = sphi 0, %s73
    %s74 = sphi 0, %s71
    %s75 = sphi 0, %s74
    %s91 = sphi 0, %s75
  $region4: #{canny_forward.2} parent=0 // loop_header_branch
    %12 = sbr.rel (%p10) target = $region8
  $region5: #{canny_forward.2} parent=0 // loop_body
    %s14 = ssub.s32 %s9, 1
    %s15 = ssub.s32 %s9, 2
    %s16 = sadd.s32 %s9, 1
    %s17 = ssub.s32 %s9, %s16
    %p18 = scmp.eq.s32.totalorder %s17, 0
    %s20 = sadd.s32 %s19, 1
    %s21 = scalar_select %p18, %s19, %s20
    %p24 = pneg %p18
    %p25 = scmp.eq.s32.totalorder %s9, 1
    %p26 = por %p24, %p25
    %p27 = scmp.ne.s32.totalorder %s19, %s22
    %p28 = scmp.eq.s32.totalorder %s9, 0
    %p29 = por %p27, %p28
    %p30 = scmp.ne.s32.totalorder %s19, %s22
    %p31 = scmp.eq.s32.totalorder %s14, 1
    %p32 = por %p30, %p31
    %p33 = scmp.ne.s32.totalorder %s22, %s23
    %p34 = scmp.eq.s32.totalorder %s14, 0
    %p35 = por %p33, %p34
    %p36 = scmp.ne.s32.totalorder %s22, %s23
    %p37 = scmp.eq.s32.totalorder %s15, 1
    %p38 = por %p36, %p37
    %p40 = scmp.ne.s32.totalorder %s23, %s39
    %p41 = scmp.eq.s32.totalorder %s15, 0
    %p42 = por %p40, %p41
    %s43 = ssub.s32 %s9, %s16
    %p44 = scmp.eq.s32.totalorder %s43, 0
    %s46 = sadd.s32 %s45, 1
    %s47 = scalar_select %p44, %s45, %s46
    %p50 = pneg %p44
    %p51 = scmp.eq.s32.totalorder %s9, 1
    %p52 = por %p50, %p51
    %p53 = scmp.ne.s32.totalorder %s45, %s48
    %p54 = scmp.eq.s32.totalorder %s9, 0
    %p55 = por %p53, %p54
    %p56 = scmp.ne.s32.totalorder %s45, %s48
    %p57 = scmp.eq.s32.totalorder %s14, 1
    %p58 = por %p56, %p57
    %p59 = scmp.ne.s32.totalorder %s48, %s49
    %p60 = scmp.eq.s32.totalorder %s14, 0
    %p61 = por %p59, %p60
    %p62 = scmp.ne.s32.totalorder %s48, %s49
    %p63 = scmp.eq.s32.totalorder %s15, 1
    %p64 = por %p62, %p63
    %p66 = scmp.ne.s32.totalorder %s49, %s65
    %p67 = scmp.eq.s32.totalorder %s15, 0
    %p68 = por %p66, %p67
    %s69 = ssub.s32 %s9, %s16
    %p70 = scmp.eq.s32.totalorder %s69, 0
    %s72 = sadd.s32 %s71, 1
    %s73 = scalar_select %p70, %s71, %s72
    %p76 = pneg %p70
    %p77 = scmp.eq.s32.totalorder %s9, 1
    %p78 = por %p76, %p77
    %p79 = scmp.ne.s32.totalorder %s71, %s74
    %p80 = scmp.eq.s32.totalorder %s9, 0
    %p81 = por %p79, %p80
    %p82 = scmp.ne.s32.totalorder %s71, %s74
    %p83 = scmp.eq.s32.totalorder %s14, 1
    %p84 = por %p82, %p83
    %p85 = scmp.ne.s32.totalorder %s74, %s75
    %p86 = scmp.eq.s32.totalorder %s14, 0
    %p87 = por %p85, %p86
    %p88 = scmp.ne.s32.totalorder %s74, %s75
    %p89 = scmp.eq.s32.totalorder %s15, 1
    %p90 = por %p88, %p89
    %p92 = scmp.ne.s32.totalorder %s75, %s91
    %p93 = scmp.eq.s32.totalorder %s15, 0
    %p94 = por %p92, %p93
    %p95 = scmp.le.s32.totalorder 1, %s9
    %p96 = scmp.lt.s32.totalorder %s9, 3
    %p97 = pnand %p95, %p96
    %p98 = pneg %p97
    // Predicated region
    $region9: #{canny_forward.2} parent=5 // pred_check
      _
    $region10: #{canny_forward.2} parent=5 // pred_check_branch
      %100 = sbr.rel (%p97) target = $region12
    $region11: #{canny_forward.2} parent=5 // pred_region
      %s101 = ssub.s32 %s9, 1
    $region12: #{canny_forward.2} parent=5 // pred_fallthru
      _
    %p102 = scmp.lt.s32.totalorder %s9, 2
    // Predicated region
    $region13: #{canny_forward.2} parent=5 // pred_check
      %p103 = pneg %p102
    $region14: #{canny_forward.2} parent=5 // pred_check_branch
      %105 = sbr.rel (%p103) target = $region16
    $region15: #{canny_forward.2} parent=5 // pred_region
      // Predicated region
      $region17: #{canny_forward.2} parent=15 // pred_check
        %p106 = pneg %p29
      $region18: #{canny_forward.2} parent=15 // pred_check_branch
        %108 = sbr.rel (%p106) target = $region20
      $region19: #{canny_forward.2} parent=15 // pred_region
        %p109 = scmp.lt.s32.totalorder %s9, 1
        %s110 = scalar_select %p109, %s9, 1
        %s111 = smul.addr %s110, 9
        %s112 = smul.addr %s111, 8
        %s113 = scalar_lea.vmem %s0, %s112
      $region20: #{canny_forward.2} parent=15 // pred_fallthru
        _
    $region16: #{canny_forward.2} parent=5 // pred_fallthru
      _
    %p114 = scmp.le.s32.totalorder 1, %s9
    %p115 = scmp.lt.s32.totalorder %s9, 3
    %p116 = pnand %p114, %p115
    %p117 = pneg %p116
    // Predicated region
    $region21: #{canny_forward.2} parent=5 // pred_check
      _
    $region22: #{canny_forward.2} parent=5 // pred_check_branch
      %119 = sbr.rel (%p116) target = $region24
    $region23: #{canny_forward.2} parent=5 // pred_region
      %s120 = ssub.s32 %s9, 1
      %p121 = scmp.lt.s32.totalorder %s14, 1
      %s122 = scalar_select %p121, %s14, 1
      %s123 = smul.addr %s122, 9
      %s124 = smul.addr %s123, 8
      %s125 = scalar_lea.vmem %s0, %s124
      %p126 = pneg %p35
      %p127 = pneg %p32
      %p128 = pneg %p61
      %p129 = pneg %p58
      %p130 = scmp.lt.s32.totalorder %s14, 1
      %s131 = scalar_select %p130, %s14, 1
      %s132 = smul.addr %s131, 3
      %s133 = smul.addr %s132, 8
      %s134 = scalar_lea.vmem %s1, %s133
      %p135 = pneg %p87
      %p136 = pneg %p84
      %p137 = scmp.lt.s32.totalorder %s14, 1
      %s138 = scalar_select %p137, %s14, 1
      %s139 = smul.addr %s138, 3
      %s140 = smul.addr %s139, 8
      %s141 = scalar_lea.vmem %s2, %s140
      %p142 = scmp.lt.s32.totalorder %s14, 1
      %s143 = scalar_select %p142, %s14, 1
      %s144 = smul.addr %s143, 9
      %s145 = smul.addr %s144, 8
      %s146 = scalar_lea.vmem %s0, %s145
      %p147 = scmp.lt.s32.totalorder %s14, 1
      %s148 = scalar_select %p147, %s14, 1
      %s149 = smul.addr %s148, 3
      %s150 = smul.addr %s149, 8
      %s151 = scalar_lea.vmem %s1, %s150
      %p152 = scmp.lt.s32.totalorder %s14, 1
      %s153 = scalar_select %p152, %s14, 1
      %s154 = smul.addr %s153, 3
      %s155 = smul.addr %s154, 8
      %s156 = scalar_lea.vmem %s2, %s155
      %v157 = vld [vmem:[%s146] sm:$0xff]
      %v158 = vld [vmem:[%s146 + $0x8] sm:$0xff]
      %v159 = vld [vmem:[%s146 + $0x10] sm:$0xff]
      %s160 = scalar_lea.vmem %s146, 24
      %v161 = vld [vmem:[%s160] sm:$0xff]
      %v162 = vld [vmem:[%s160 + $0x8] sm:$0xff]
      %v163 = vld [vmem:[%s160 + $0x10] sm:$0xff]
      %v164 = vadd.f32 %v157, %v161
      %v165 = vadd.f32 %v158, %v162
      %v166 = vadd.f32 %v159, %v163
      %s167 = scalar_lea.vmem %s146, 48
      %v168 = vld [vmem:[%s167] sm:$0xff]
      %v169 = vld [vmem:[%s167 + $0x8] sm:$0xff]
      %v170 = vld [vmem:[%s167 + $0x10] sm:$0xff]
      %v171 = vadd.f32 %v164, %v168
      %v172 = vadd.f32 %v165, %v169
      %v173 = vadd.f32 %v166, %v170
      %v174 = vmul.f32 %v171, 0.33333334
      %v175 = vmul.f32 %v172, 0.33333334
      %v176 = vmul.f32 %v173, 0.33333334
      %v177 = vmul.f32 %v174, 0.49867645
      %v178 = vmul.f32 %v175, 0.49867645
      %v179 = vmul.f32 %v176, 0.49867645
      %180 = vrot.lane.b32.xlu0 %v174, 3
      %v181 = vpop.permute.xlu0 %180
      %182 = vrot.lane.b32.xlu0 %v175, 3
      %v183 = vpop.permute.xlu0 %182
      %184 = vrot.lane.b32.xlu0 %v176, 3
      %v185 = vpop.permute.xlu0 %184
      %v186 = vmul.f32 %v181, 0.00044074337
      %v187 = vmul.f32 %v183, 0.00044074337
      %v188 = vmul.f32 %v185, 0.00044074337
      %v189 = vadd.f32 %v177, %v186
      %v190 = vadd.f32 %v178, %v187
      %v191 = vadd.f32 %v179, %v188
      %192 = vrot.lane.b32.xlu0 %v174, 2
      %v193 = vpop.permute.xlu0 %192
      %194 = vrot.lane.b32.xlu0 %v175, 2
      %v195 = vpop.permute.xlu0 %194
      %196 = vrot.lane.b32.xlu0 %v176, 2
      %v197 = vpop.permute.xlu0 %196
      %v198 = vmul.f32 %v193, 0.021910314
      %v199 = vmul.f32 %v195, 0.021910314
      %v200 = vmul.f32 %v197, 0.021910314
      %v201 = vadd.f32 %v189, %v198
      %v202 = vadd.f32 %v190, %v199
      %v203 = vadd.f32 %v191, %v200
      %204 = vrot.lane.b32.xlu0 %v174, 1
      %v205 = vpop.permute.xlu0 %204
      %206 = vrot.lane.b32.xlu0 %v175, 1
      %v207 = vpop.permute.xlu0 %206
      %208 = vrot.lane.b32.xlu0 %v176, 1
      %v209 = vpop.permute.xlu0 %208
      %v210 = vmul.f32 %v205, 0.22831072
      %v211 = vmul.f32 %v207, 0.22831072
      %v212 = vmul.f32 %v209, 0.22831072
      %v213 = vadd.f32 %v201, %v210
      %v214 = vadd.f32 %v202, %v211
      %v215 = vadd.f32 %v203, %v212
      %216 = vrot.lane.b32.xlu0 %v174, 127
      %v217 = vpop.permute.xlu0 %216
      %218 = vrot.lane.b32.xlu0 %v175, 127
      %v219 = vpop.permute.xlu0 %218
      %220 = vrot.lane.b32.xlu0 %v176, 127
      %v221 = vpop.permute.xlu0 %220
      %v222 = vmul.f32 %v217, 0.22831072
      %v223 = vmul.f32 %v219, 0.22831072
      %v224 = vmul.f32 %v221, 0.22831072
      %v225 = vadd.f32 %v213, %v222
      %v226 = vadd.f32 %v214, %v223
      %v227 = vadd.f32 %v215, %v224
      %228 = vrot.lane.b32.xlu0 %v174, 126
      %v229 = vpop.permute.xlu0 %228
      %230 = vrot.lane.b32.xlu0 %v175, 126
      %v231 = vpop.permute.xlu0 %230
      %232 = vrot.lane.b32.xlu0 %v176, 126
      %v233 = vpop.permute.xlu0 %232
      %v234 = vmul.f32 %v229, 0.021910314
      %v235 = vmul.f32 %v231, 0.021910314
      %v236 = vmul.f32 %v233, 0.021910314
      %v237 = vadd.f32 %v225, %v234
      %v238 = vadd.f32 %v226, %v235
      %v239 = vadd.f32 %v227, %v236
      %240 = vrot.lane.b32.xlu0 %v174, 125
      %v241 = vpop.permute.xlu0 %240
      %242 = vrot.lane.b32.xlu0 %v175, 125
      %v243 = vpop.permute.xlu0 %242
      %244 = vrot.lane.b32.xlu0 %v176, 125
      %v245 = vpop.permute.xlu0 %244
      %v246 = vmul.f32 %v241, 0.00044074337
      %v247 = vmul.f32 %v243, 0.00044074337
      %v248 = vmul.f32 %v245, 0.00044074337
      %v249 = vadd.f32 %v237, %v246
      %v250 = vadd.f32 %v238, %v247
      %v251 = vadd.f32 %v239, %v248
      %v252 = vmul.f32 %v249, 0.49867645
      %v253 = vmul.f32 %v250, 0.49867645
      %v254 = vmul.f32 %v251, 0.49867645
      %v255 = vrot.slane %v249, 5
      %v256 = vrot.slane %v250, 5
      %v257 = vrot.slane %v251, 5
      %v258 = vlaneseq
      %v259 = vshrl.u32 %v258, 7
      %vm260 = vcmp.lt.s32.totalorder %v259, 3
      %v261 = vsel %vm260, %v256, %v257
      %v262 = vsel %vm260, %v255, %v256
      %v263 = vsel %vm260, %v257, %v255
      %v264 = vmul.f32 %v263, 0.00044074337
      %v265 = vmul.f32 %v262, 0.00044074337
      %v266 = vmul.f32 %v261, 0.00044074337
      %v267 = vadd.f32 %v252, %v264
      %v268 = vadd.f32 %v253, %v265
      %v269 = vadd.f32 %v254, %v266
      %v270 = vrot.slane %v249, 6
      %v271 = vrot.slane %v250, 6
      %v272 = vrot.slane %v251, 6
      %vm273 = vcmp.lt.s32.totalorder %v259, 2
      %v274 = vsel %vm273, %v271, %v272
      %v275 = vsel %vm273, %v270, %v271
      %v276 = vsel %vm273, %v272, %v270
      %v277 = vmul.f32 %v276, 0.021910314
      %v278 = vmul.f32 %v275, 0.021910314
      %v279 = vmul.f32 %v274, 0.021910314
      %v280 = vadd.f32 %v267, %v277
      %v281 = vadd.f32 %v268, %v278
      %v282 = vadd.f32 %v269, %v279
      %v283 = vrot.slane %v249, 7
      %v284 = vrot.slane %v250, 7
      %v285 = vrot.slane %v251, 7
      %vm286 = vcmp.lt.s32.totalorder %v259, 1
      %v287 = vsel %vm286, %v284, %v285
      %v288 = vsel %vm286, %v283, %v284
      %v289 = vsel %vm286, %v285, %v283
      %v290 = vmul.f32 %v289, 0.22831072
      %v291 = vmul.f32 %v288, 0.22831072
      %v292 = vmul.f32 %v287, 0.22831072
      %v293 = vadd.f32 %v280, %v290
      %v294 = vadd.f32 %v281, %v291
      %v295 = vadd.f32 %v282, %v292
      %v296 = vrot.slane %v249, 1
      %v297 = vrot.slane %v250, 1
      %v298 = vrot.slane %v251, 1
      %vm299 = vcmp.lt.s32.totalorder %v259, 7
      %v300 = vsel %vm299, %v297, %v298
      %v301 = vsel %vm299, %v296, %v297
      %v302 = vsel %vm299, %v298, %v296
      %v303 = vmul.f32 %v301, 0.22831072
      %v304 = vmul.f32 %v300, 0.22831072
      %v305 = vmul.f32 %v302, 0.22831072
      %v306 = vadd.f32 %v293, %v303
      %v307 = vadd.f32 %v294, %v304
      %v308 = vadd.f32 %v295, %v305
      %v309 = vrot.slane %v249, 2
      %v310 = vrot.slane %v250, 2
      %v311 = vrot.slane %v251, 2
      %vm312 = vcmp.lt.s32.totalorder %v259, 6
      %v313 = vsel %vm312, %v310, %v311
      %v314 = vsel %vm312, %v309, %v310
      %v315 = vsel %vm312, %v311, %v309
      %v316 = vmul.f32 %v314, 0.021910314
      %v317 = vmul.f32 %v313, 0.021910314
      %v318 = vmul.f32 %v315, 0.021910314
      %v319 = vadd.f32 %v306, %v316
      %v320 = vadd.f32 %v307, %v317
      %v321 = vadd.f32 %v308, %v318
      %v322 = vrot.slane %v249, 3
      %v323 = vrot.slane %v250, 3
      %v324 = vrot.slane %v251, 3
      %vm325 = vcmp.lt.s32.totalorder %v259, 5
      %v326 = vsel %vm325, %v323, %v324
      %v327 = vsel %vm325, %v322, %v323
      %v328 = vsel %vm325, %v324, %v322
      %v329 = vmul.f32 %v327, 0.00044074337
      %v330 = vmul.f32 %v326, 0.00044074337
      %v331 = vmul.f32 %v328, 0.00044074337
      %v332 = vadd.f32 %v319, %v329
      %v333 = vadd.f32 %v320, %v330
      %v334 = vadd.f32 %v321, %v331
      %335 = vrot.lane.b32.xlu0 %v332, 1
      %v336 = vpop.permute.xlu0 %335
      %337 = vrot.lane.b32.xlu0 %v333, 1
      %v338 = vpop.permute.xlu0 %337
      %339 = vrot.lane.b32.xlu0 %v334, 1
      %v340 = vpop.permute.xlu0 %339
      %341 = vrot.lane.b32.xlu0 %v332, 127
      %v342 = vpop.permute.xlu0 %341
      %343 = vrot.lane.b32.xlu0 %v333, 127
      %v344 = vpop.permute.xlu0 %343
      %345 = vrot.lane.b32.xlu0 %v334, 127
      %v346 = vpop.permute.xlu0 %345
      %v347 = vsub.f32 %v336, %v342
      %v348 = vsub.f32 %v338, %v344
      %v349 = vsub.f32 %v340, %v346
      %v350 = vmul.f32 %v332, 2.0
      %v351 = vmul.f32 %v333, 2.0
      %v352 = vmul.f32 %v334, 2.0
      %v353 = vadd.f32 %v336, %v350
      %v354 = vadd.f32 %v338, %v351
      %v355 = vadd.f32 %v340, %v352
      %v356 = vadd.f32 %v353, %v342
      %v357 = vadd.f32 %v354, %v344
      %v358 = vadd.f32 %v355, %v346
      %v359 = vrot.slane %v347, 7
      %v360 = vrot.slane %v348, 7
      %v361 = vrot.slane %v349, 7
      %v362 = vsel %vm286, %v360, %v361
      %v363 = vsel %vm286, %v359, %v360
      %v364 = vsel %vm286, %v361, %v359
      %v365 = vmul.f32 %v347, 2.0
      %v366 = vmul.f32 %v348, 2.0
      %v367 = vmul.f32 %v349, 2.0
      %v368 = vadd.f32 %v364, %v365
      %v369 = vadd.f32 %v363, %v366
      %v370 = vadd.f32 %v362, %v367
      %v371 = vrot.slane %v347, 1
      %v372 = vrot.slane %v348, 1
      %v373 = vrot.slane %v349, 1
      %v374 = vsel %vm299, %v372, %v373
      %v375 = vsel %vm299, %v371, %v372
      %v376 = vsel %vm299, %v373, %v371
      %v377 = vadd.f32 %v368, %v375
      %v378 = vadd.f32 %v369, %v374
      %v379 = vadd.f32 %v370, %v376
      %v380 = vrot.slane %v356, 7
      %v381 = vrot.slane %v357, 7
      %v382 = vrot.slane %v358, 7
      %v383 = vsel %vm286, %v381, %v382
      %v384 = vsel %vm286, %v380, %v381
      %v385 = vsel %vm286, %v382, %v380
      %v386 = vrot.slane %v356, 1
      %v387 = vrot.slane %v357, 1
      %v388 = vrot.slane %v358, 1
      %v389 = vsel %vm299, %v387, %v388
      %v390 = vsel %vm299, %v386, %v387
      %v391 = vsel %vm299, %v388, %v386
      %v392 = vsub.f32 %v385, %v390
      %v393 = vsub.f32 %v384, %v389
      %v394 = vsub.f32 %v383, %v391
      %v395 = vmul.f32 %v377, %v377
      %v396 = vmul.f32 %v378, %v378
      %v397 = vmul.f32 %v379, %v379
      %v398 = vmul.f32 %v392, %v392
      %v399 = vmul.f32 %v393, %v393
      %v400 = vmul.f32 %v394, %v394
      %v401 = vadd.f32 %v395, %v398
      %v402 = vadd.f32 %v396, %v399
      %v403 = vadd.f32 %v397, %v400
      %v404 = vrsqrt.pop %v401
      %v405 = vmul.f32 %v401, %v404
      %vm406 = vcmp.eq.f32.partialorder %v401, inf
      %v407 = vsel %vm406, %v401, %v405
      %vm408 = vcmp.eq.f32.partialorder %v401, 0.0
      %v409 = vand.u32 %v401, 2147483648
      %v410 = vsel %vm408, %v409, %v407
      %v411 = vrsqrt.pop %v402
      %v412 = vmul.f32 %v402, %v411
      %vm413 = vcmp.eq.f32.partialorder %v402, inf
      %v414 = vsel %vm413, %v402, %v412
      %vm415 = vcmp.eq.f32.partialorder %v402, 0.0
      %v416 = vand.u32 %v402, 2147483648
      %v417 = vsel %vm415, %v416, %v414
      %v418 = vrsqrt.pop %v403
      %v419 = vmul.f32 %v403, %v418
      %vm420 = vcmp.eq.f32.partialorder %v403, inf
      %v421 = vsel %vm420, %v403, %v419
      %vm422 = vcmp.eq.f32.partialorder %v403, 0.0
      %v423 = vand.u32 %v403, 2147483648
      %v424 = vsel %vm422, %v423, %v421
      %v425 = vadd.s32 %v259, 8
      %v426 = vadd.s32 %v259, 16
      %v427 = vlaneseq
      %v428 = vand.u32 %v427, 127
      %vm429 = vcmp.ge.s32.totalorder %v259, 4
      %vm430 = vcmp.ge.s32.totalorder %v425, 4
      %vm431 = vcmp.ge.s32.totalorder %v426, 4
      %vm432 = vcmp.lt.s32.totalorder %v259, 20
      %vm433 = vcmp.lt.s32.totalorder %v425, 20
      %vm434 = vcmp.lt.s32.totalorder %v426, 20
      %vm435 = vmand %vm429, %vm432
      %vm436 = vmand %vm430, %vm433
      %vm437 = vmand %vm431, %vm434
      %vm438 = vcmp.ge.s32.totalorder %v428, 4
      %vm439 = vmand %vm435, %vm438
      %vm440 = vmand %vm436, %vm438
      %vm441 = vmand %vm437, %vm438
      %vm442 = vcmp.lt.s32.totalorder %v428, 20
      %vm443 = vmand %vm439, %vm442
      %vm444 = vmand %vm440, %vm442
      %vm445 = vmand %vm441, %vm442
      %v446 = vsel %vm443, %v410, 0.0
      %v447 = vsel %vm444, %v417, 0.0
      %v448 = vsel %vm445, %v424, 0.0
      %449 = vst [vmem:[%s151] sm:$0xff] %v446
      %450 = vst [vmem:[%s151 + $0x8] sm:$0xff] %v447
      %451 = vst [vmem:[%s151 + $0x10] sm:$0xff] %v448
      %v452 = vand.u32 2147483647, %v377
      %v453 = vand.u32 2147483647, %v378
      %v454 = vand.u32 2147483647, %v379
      %v455 = vand.u32 2147483647, %v392
      %v456 = vand.u32 2147483647, %v393
      %v457 = vand.u32 2147483647, %v394
      %v458 = vmul.f32 %v452, 0.41421318
      %v459 = vmul.f32 %v453, 0.41421318
      %v460 = vmul.f32 %v454, 0.41421318
      %vm461 = vcmp.lt.f32.partialorder %v455, %v458
      %vm462 = vcmp.lt.f32.partialorder %v456, %v459
      %vm463 = vcmp.lt.f32.partialorder %v457, %v460
      %v464 = vmul.f32 %v452, 2.4142067
      %v465 = vmul.f32 %v453, 2.4142067
      %v466 = vmul.f32 %v454, 2.4142067
      %vm467 = vcmp.ge.f32.partialorder %v455, %v464
      %vm468 = vcmp.ge.f32.partialorder %v456, %v465
      %vm469 = vcmp.ge.f32.partialorder %v457, %v466
      %vm470 = vcmp.gt.f32.partialorder %v377, 0.0
      %vm471 = vcmp.gt.f32.partialorder %v378, 0.0
      %vm472 = vcmp.gt.f32.partialorder %v379, 0.0
      %v473 = vsel %vm470, 4, 0
      %v474 = vsel %vm471, 4, 0
      %v475 = vsel %vm472, 4, 0
      %vm476 = vcmp.gt.f32.partialorder %v392, 0.0
      %vm477 = vcmp.gt.f32.partialorder %v393, 0.0
      %vm478 = vcmp.gt.f32.partialorder %v394, 0.0
      %vm479 = vcmp.lt.f32.partialorder %v392, 0.0
      %vm480 = vcmp.lt.f32.partialorder %v393, 0.0
      %vm481 = vcmp.lt.f32.partialorder %v394, 0.0
      %v482 = vsel %vm479, 2, 4
      %v483 = vsel %vm480, 2, 4
      %v484 = vsel %vm481, 2, 4
      %v485 = vsel %vm476, 6, %v482
      %v486 = vsel %vm477, 6, %v483
      %v487 = vsel %vm478, 6, %v484
      %v488 = vsel %vm476, 5, 3
      %v489 = vsel %vm477, 5, 3
      %v490 = vsel %vm478, 5, 3
      %v491 = vsel %vm476, 7, 1
      %v492 = vsel %vm477, 7, 1
      %v493 = vsel %vm478, 7, 1
      %v494 = vsel %vm470, %v488, %v491
      %v495 = vsel %vm471, %v489, %v492
      %v496 = vsel %vm472, %v490, %v493
      %v497 = vsel %vm467, %v485, %v494
      %v498 = vsel %vm468, %v486, %v495
      %v499 = vsel %vm469, %v487, %v496
      %v500 = vsel %vm461, %v473, %v497
      %v501 = vsel %vm462, %v474, %v498
      %v502 = vsel %vm463, %v475, %v499
      %503 = vst [vmem:[%s156] sm:$0xff] %v500
      %504 = vst [vmem:[%s156 + $0x8] sm:$0xff] %v501
      %505 = vst [vmem:[%s156 + $0x10] sm:$0xff] %v502
      %p506 = scmp.lt.s32.totalorder %s14, 1
      %s507 = scalar_select %p506, %s14, 1
      %s508 = smul.addr %s507, 3
      %s509 = smul.addr %s508, 8
      %s510 = scalar_lea.vmem %s1, %s509
      %p511 = scmp.lt.s32.totalorder %s14, 1
      %s512 = scalar_select %p511, %s14, 1
      %s513 = smul.addr %s512, 3
      %s514 = smul.addr %s513, 8
      %s515 = scalar_lea.vmem %s2, %s514
      // Predicated region
      $region25: #{canny_forward.2} parent=23 // pred_check
        %p516 = pneg %p58
      $region26: #{canny_forward.2} parent=23 // pred_check_branch
        %518 = sbr.rel (%p516) target = $region28
      $region27: #{canny_forward.2} parent=23 // pred_region
        _
      $region28: #{canny_forward.2} parent=23 // pred_fallthru
        _
      // Predicated region
      $region29: #{canny_forward.2} parent=23 // pred_check
        %p519 = pneg %p84
      $region30: #{canny_forward.2} parent=23 // pred_check_branch
        %521 = sbr.rel (%p519) target = $region32
      $region31: #{canny_forward.2} parent=23 // pred_region
        _
      $region32: #{canny_forward.2} parent=23 // pred_fallthru
        _
    $region24: #{canny_forward.2} parent=5 // pred_fallthru
      _
    %p522 = scmp.le.s32.totalorder 2, %s9
    // Predicated region
    $region33: #{canny_forward.2} parent=5 // pred_check
      %p523 = pneg %p522
    $region34: #{canny_forward.2} parent=5 // pred_check_branch
      %525 = sbr.rel (%p523) target = $region36
    $region35: #{canny_forward.2} parent=5 // pred_region
      %s526 = ssub.s32 %s9, 2
      // Predicated region
      $region37: #{canny_forward.2} parent=35 // pred_check
        %p527 = pneg %p64
      $region38: #{canny_forward.2} parent=35 // pred_check_branch
        %529 = sbr.rel (%p527) target = $region40
      $region39: #{canny_forward.2} parent=35 // pred_region
        %p530 = scmp.lt.s32.totalorder %s15, 1
        %s531 = scalar_select %p530, %s15, 1
        %s532 = smul.addr %s531, 3
        %s533 = smul.addr %s532, 8
        %s534 = scalar_lea.vmem %s1, %s533
      $region40: #{canny_forward.2} parent=35 // pred_fallthru
        _
      // Predicated region
      $region41: #{canny_forward.2} parent=35 // pred_check
        %p535 = pneg %p90
      $region42: #{canny_forward.2} parent=35 // pred_check_branch
        %537 = sbr.rel (%p535) target = $region44
      $region43: #{canny_forward.2} parent=35 // pred_region
        %p538 = scmp.lt.s32.totalorder %s15, 1
        %s539 = scalar_select %p538, %s15, 1
        %s540 = smul.addr %s539, 3
        %s541 = smul.addr %s540, 8
        %s542 = scalar_lea.vmem %s2, %s541
      $region44: #{canny_forward.2} parent=35 // pred_fallthru
        _
    $region36: #{canny_forward.2} parent=5 // pred_fallthru
      _
  $region6: #{canny_forward.2} parent=0 // loop_footer
    %s13 = sadd.s32 1, %s9
  $region7: #{canny_forward.2} parent=0 // loop_footer_branch
    %8 = sbr.rel target = $region3
  $region8: #{canny_forward.2} parent=0 // loop_exit
    _

</llo_original>
